<compile_context>
chip_gen: v6e
topology: v6e:2x2x1
jax: 0.10.0
libtpu: 0.0.40
codegen_flags: <defaults>
</compile_context>

<pallas_src>
import jax
import jax.numpy as jnp
from jax.experimental import pallas as pl
from jax.experimental.pallas import tpu as pltpu


def _ada_ln_modulate_kernel(x_ref, scale_ref, shift_ref, o_ref, *, eps):
    # x_ref: (1, tT, D)   scale_ref/shift_ref: (1, 1, D)   o_ref: (1, tT, D)
    x = x_ref[0].astype(jnp.float32)                        # (tT, D)

    # LayerNorm over the last axis (no affine), biased variance.
    mean = jnp.mean(x, axis=-1, keepdims=True)              # (tT, 1)
    xc = x - mean                                           # reused below
    var = jnp.mean(xc * xc, axis=-1, keepdims=True)         # (tT, 1)
    rstd = jax.lax.rsqrt(var + eps)                         # (tT, 1)

    scale = scale_ref[0].astype(jnp.float32)                # (1, D)
    shift = shift_ref[0].astype(jnp.float32)                # (1, D)

    # Fold rstd and (1 + scale) into one per-element coefficient, then a
    # single fma-style pass; write the output tile exactly once.
    a = rstd * (1.0 + scale)                                # (tT, D)
    o_ref[0] = (xc * a + shift).astype(o_ref.dtype)


def _pick_block_t(T, D, itemsize, vmem_budget_bytes=24 * 1024 * 1024):
    """Largest sublane-aligned token tile whose double-buffered in+out fits budget."""
    row_bytes = max(1, D * itemsize)
    # 2 input buffers + 2 output buffers per tile (double buffering).
    max_rows = max(1, vmem_budget_bytes // (4 * row_bytes))
    sub = 8 if itemsize >= 4 else 16                        # f32 / bf16 sublane packing
    block_t = min(T, max_rows, 1024)
    if block_t >= sub:
        block_t = (block_t // sub) * sub
    else:
        block_t = T                                         # tiny T: take it whole
    return max(1, block_t)


def ada_layer_norm(x, z, proj_w, proj_b, *, eps=1e-6, block_t=None):
    """x: (B, T, D), z: (B, 1, D), proj_w: (2D, D) [torch layout], proj_b: (2D,)."""
    B, T, D = x.shape
    assert z.shape == (B, 1, D)
    assert proj_w.shape == (2 * D, D) and proj_b.shape == (2 * D,)

    # --- Conditioning path hoisted to XLA: stats = SiLU(z) @ W^T + b ----------
    # No explicit proj_w.T materialization; einsum contracts on W's 2nd axis.
    z2 = z.reshape(B, D).astype(jnp.float32)
    z_act = z2 * jax.nn.sigmoid(z2)
    stats = jnp.einsum("bd,od->bo", z_act, proj_w.astype(jnp.float32))
    stats = stats + proj_b.astype(jnp.float32)
    scale = stats[:, :D].reshape(B, 1, D)                   # keep f32 for LN numerics
    shift = stats[:, D:].reshape(B, 1, D)

    # --- Tile the token axis --------------------------------------------------
    itemsize = jnp.dtype(x.dtype).itemsize
    if block_t is None:
        block_t = _pick_block_t(T, D, itemsize)
    n_t = pl.cdiv(T, block_t)
    t_pad = n_t * block_t
    x_in = x if t_pad == T else jnp.pad(x, ((0, 0), (0, t_pad - T), (0, 0)))

    tile_bytes = block_t * D * itemsize
    vmem_limit = int(min(48 * 1024 * 1024,
                         max(16 * 1024 * 1024, 6 * tile_bytes + (1 << 20))))

    kernel = lambda *refs: _ada_ln_modulate_kernel(*refs, eps=eps)

    out = pl.pallas_call(
        kernel,
        out_shape=jax.ShapeDtypeStruct((B, t_pad, D), x.dtype),
        grid_spec=pltpu.PrefetchScalarGridSpec(
            num_scalar_prefetch=0,
            grid=(B, n_t),
            in_specs=[
                pl.BlockSpec((1, block_t, D), lambda b, t: (b, t, 0)),  # x tile
                pl.BlockSpec((1, 1, D), lambda b, t: (b, 0, 0)),        # scale
                pl.BlockSpec((1, 1, D), lambda b, t: (b, 0, 0)),        # shift
            ],
            out_specs=pl.BlockSpec((1, block_t, D), lambda b, t: (b, t, 0)),
        ),
        compiler_params=pltpu.CompilerParams(
            dimension_semantics=("parallel", "parallel"),
            vmem_limit_bytes=vmem_limit),
    )(x_in, scale, shift)

    return out if t_pad == T else out[:, :T, :]


def _reference(x, z, proj_w, proj_b, eps=1e-6):
    z_act = z * jax.nn.sigmoid(z)
    stats = jnp.einsum("bsd,od->bso", z_act, proj_w) + proj_b
    D = x.shape[-1]
    scale, shift = stats[..., :D], stats[..., D:]
    mean = jnp.mean(x, axis=-1, keepdims=True)
    var = jnp.mean(jnp.square(x - mean), axis=-1, keepdims=True)
    xn = (x - mean) * jax.lax.rsqrt(var + eps)
    return xn * (1.0 + scale) + shift


if __name__ == "__main__":
    B, T, D = 2, 8, 32
    key = jax.random.PRNGKey(0)
    kx, kz, kw, kb = jax.random.split(key, 4)

    x = jax.random.normal(kx, (B, T, D), dtype=jnp.float32)
    z = jax.random.normal(kz, (B, 1, D), dtype=jnp.float32)

    # nn.Linear(dim, 2*dim): weight (2D, D), bias (2D,) -- deterministic init.
    proj_w = 0.1 * jax.random.normal(kw, (2 * D, D), dtype=jnp.float32)
    proj_b = 0.1 * jax.random.normal(kb, (2 * D,), dtype=jnp.float32)

    out = ada_layer_norm(x, z, proj_w, proj_b, eps=1e-6)
    out = jax.block_until_ready(out)

    ref = _reference(x, z, proj_w, proj_b, eps=1e-6)
    assert out.shape == (B, T, D)
    assert jnp.allclose(out, ref, atol=1e-5, rtol=1e-5)

    print("KERNEL_OK")
</pallas_src>

<mosaic_0001>
module attributes {stable_mosaic.version = 11 : i64} {
  func.func @_lambda_(%arg0: i32, %arg1: i32, %arg2: memref<1x8x32xf32, #tpu.memory_space<vmem>>, %arg3: memref<1x1x32xf32, #tpu.memory_space<vmem>>, %arg4: memref<1x1x32xf32, #tpu.memory_space<vmem>>, %arg5: memref<1x8x32xf32, #tpu.memory_space<vmem>>) attributes {dimension_semantics = [#tpu.dimension_semantics<parallel>, #tpu.dimension_semantics<parallel>], iteration_bounds = array<i64: 2, 1>, scalar_prefetch = 0 : i64, scratch_operands = 0 : i64, tpu.core_type = #tpu.core_type<tc>, window_params = [{transform_indices = @transform_0, window_bounds = array<i64: 1, 8, 32>}, {transform_indices = @transform_1, window_bounds = array<i64: 1, 1, 32>}, {transform_indices = @transform_2, window_bounds = array<i64: 1, 1, 32>}, {transform_indices = @transform_3, window_bounds = array<i64: 1, 8, 32>}]} {
    %c0 = arith.constant 0 : index
    %c0_0 = arith.constant 0 : index
    %c0_1 = arith.constant 0 : index
    %0 = vector.load %arg2[%c0, %c0_0, %c0_1] : memref<1x8x32xf32, #tpu.memory_space<vmem>>, vector<1x8x32xf32>
    %1 = vector.shape_cast %0 : vector<1x8x32xf32> to vector<8x32xf32>
    %cst = arith.constant dense<0.000000e+00> : vector<8xf32>
    %2 = vector.multi_reduction <add>, %1, %cst [1] : vector<8x32xf32> to vector<8xf32>
    %3 = vector.shape_cast %2 : vector<8xf32> to vector<8x1xf32>
    %cst_2 = arith.constant 3.200000e+01 : f32
    %4 = vector.broadcast %cst_2 : f32 to vector<8x1xf32>
    %5 = arith.divf %3, %4 : vector<8x1xf32>
    %6 = vector.broadcast %5 : vector<8x1xf32> to vector<8x32xf32>
    %7 = arith.subf %1, %6 : vector<8x32xf32>
    %8 = arith.mulf %7, %7 : vector<8x32xf32>
    %cst_3 = arith.constant dense<0.000000e+00> : vector<8xf32>
    %9 = vector.multi_reduction <add>, %8, %cst_3 [1] : vector<8x32xf32> to vector<8xf32>
    %10 = vector.shape_cast %9 : vector<8xf32> to vector<8x1xf32>
    %cst_4 = arith.constant 3.200000e+01 : f32
    %11 = vector.broadcast %cst_4 : f32 to vector<8x1xf32>
    %12 = arith.divf %10, %11 : vector<8x1xf32>
    %cst_5 = arith.constant 9.99999997E-7 : f32
    %13 = vector.broadcast %cst_5 : f32 to vector<8x1xf32>
    %14 = arith.addf %12, %13 : vector<8x1xf32>
    %15 = math.rsqrt %14 : vector<8x1xf32>
    %c0_6 = arith.constant 0 : index
    %c0_7 = arith.constant 0 : index
    %c0_8 = arith.constant 0 : index
    %16 = vector.load %arg3[%c0_6, %c0_7, %c0_8] : memref<1x1x32xf32, #tpu.memory_space<vmem>>, vector<1x1x32xf32>
    %17 = vector.shape_cast %16 : vector<1x1x32xf32> to vector<1x32xf32>
    %c0_9 = arith.constant 0 : index
    %c0_10 = arith.constant 0 : index
    %c0_11 = arith.constant 0 : index
    %18 = vector.load %arg4[%c0_9, %c0_10, %c0_11] : memref<1x1x32xf32, #tpu.memory_space<vmem>>, vector<1x1x32xf32>
    %19 = vector.shape_cast %18 : vector<1x1x32xf32> to vector<1x32xf32>
    %cst_12 = arith.constant 1.000000e+00 : f32
    %20 = vector.broadcast %cst_12 : f32 to vector<1x32xf32>
    %21 = arith.addf %20, %17 : vector<1x32xf32>
    %22 = vector.broadcast %15 : vector<8x1xf32> to vector<8x32xf32>
    %23 = vector.broadcast %21 : vector<1x32xf32> to vector<8x32xf32>
    %24 = arith.mulf %22, %23 : vector<8x32xf32>
    %25 = arith.mulf %7, %24 : vector<8x32xf32>
    %26 = vector.broadcast %19 : vector<1x32xf32> to vector<8x32xf32>
    %27 = arith.addf %25, %26 : vector<8x32xf32>
    %c0_13 = arith.constant 0 : index
    %c0_14 = arith.constant 0 : index
    %c0_15 = arith.constant 0 : index
    %28 = vector.load %arg5[%c0_13, %c0_14, %c0_15] : memref<1x8x32xf32, #tpu.memory_space<vmem>>, vector<1x8x32xf32>
    %29 = vector.shape_cast %28 : vector<1x8x32xf32> to vector<8x32xf32>
    %30 = vector.shape_cast %27 : vector<8x32xf32> to vector<1x8x32xf32>
    tpu.vector_store %arg5[%c0_13, %c0_14, %c0_15], %30 {strides = array<i32>} : memref<1x8x32xf32, #tpu.memory_space<vmem>>, vector<1x8x32xf32>,
    return
  }
  func.func @transform_0(%arg0: i32, %arg1: i32) -> (i32, i32, i32) {
    %c0_i32 = arith.constant 0 : i32
    %c0_i32_0 = arith.constant 0 : i32
    return %arg0, %arg1, %c0_i32 : i32, i32, i32
  }
  func.func @transform_1(%arg0: i32, %arg1: i32) -> (i32, i32, i32) {
    %c0_i32 = arith.constant 0 : i32
    %c0_i32_0 = arith.constant 0 : i32
    %c0_i32_1 = arith.constant 0 : i32
    return %arg0, %c0_i32, %c0_i32_0 : i32, i32, i32
  }
  func.func @transform_2(%arg0: i32, %arg1: i32) -> (i32, i32, i32) {
    %c0_i32 = arith.constant 0 : i32
    %c0_i32_0 = arith.constant 0 : i32
    %c0_i32_1 = arith.constant 0 : i32
    return %arg0, %c0_i32, %c0_i32_0 : i32, i32, i32
  }
  func.func @transform_3(%arg0: i32, %arg1: i32) -> (i32, i32, i32) {
    %c0_i32 = arith.constant 0 : i32
    %c0_i32_0 = arith.constant 0 : i32
    return %arg0, %arg1, %c0_i32 : i32, i32, i32
  }
}

</mosaic_0001>

<llo_original>
// kernel: tpu_custom_call.1
$region0: #{tpu_custom_call.1}
  #allocation0 [shape = 'u32[]', space=smem, size = 0x4, offset = 0x4, fixed_abs, tag = 'smem constant byte address 0x4 - core index']
  #allocation1 [shape = 'u32[144,128]{1,0:T(1,128)}', space=vmem, size = 0x12000, scoped, tag = 'internal scratch']
  %s0 = inlined_call_operand.hbm [shape: f32[2,8,32], index: 0, kind: input, shape index: {}]
  %s1 = inlined_call_operand.hbm [shape: f32[2,1,32], index: 1, kind: input, shape index: {}]
  %s2 = inlined_call_operand.vmem [shape: f32[2,1,32], index: 2, kind: input, shape index: {}]
  %s3 = inlined_call_operand.hbm [shape: f32[2,8,32], index: 3, kind: output, shape index: {}]
  %s4 = sld [smem:[#allocation0]]
  $region53: #{tpu_custom_call.1} parent=0
    _
  %s6 = ssub.s32 1, %s4
  %s7 = scalar_select 0, %s6, %s4
  $region1: #{tpu_custom_call.1} parent=0
    #allocation2 [shape = 'u8[8192]{0}', space=vmem, size = 0x2000, scoped, tag = 'input window, operand 0']
    #allocation3 [shape = 's32[2]{0}', space=sflag, size = 0x8, scoped, tag = 'scoped memory for tpu_custom_call.1']
    #allocation4 [shape = 's32[2]{0}', space=sflag, size = 0x8, scoped, tag = 'scoped memory for tpu_custom_call.1']
    #allocation5 [shape = 'u8[1024]{0}', space=vmem, size = 0x400, scoped, tag = 'input window, operand 1']
    #allocation6 [shape = 's32[2]{0}', space=sflag, size = 0x8, scoped, tag = 'scoped memory for tpu_custom_call.1']
    #allocation7 [shape = 'u8[8192]{0}', space=vmem, size = 0x2000, scoped, tag = 'output window, operand 0']
    %8 = vsyncpa [#allocation3], 0
    %s9 = scalar_lea.sflag [#allocation3], 1
    %10 = vsyncpa %s9, 0
    %11 = vsyncpa [#allocation6], 0
    %s12 = scalar_lea.sflag [#allocation6], 1
    %13 = vsyncpa %s12, 0
    %14 = vsyncpa [#allocation4], 0
    %s15 = scalar_lea.sflag [#allocation4], 1
    %16 = vsyncpa %s15, 0
    loop: start=0, step=1, limit=4
    $region2: #{tpu_custom_call.1} parent=1 // loop_pre_header
      _
    $region3: #{tpu_custom_call.1} parent=1 // loop_header
      %s18 = sphi 0, %s22
      %p19 = scmp.ge.s32.totalorder %s18, 4
      %s25 = sphi 0, %s37
      %s26 = sphi 0, %s33
      %s27 = sphi 0, %s25
      %s28 = sphi 0, %s26
      %s29 = sphi 0, %s27
      %s30 = sphi 0, %s28
      %s42 = sphi 0, %s44
      %s45 = sphi 0, %s42
      %s46 = sphi 0, %s45
      %s62 = sphi 0, %s46
      %s68 = sphi 0, %s70
      %s71 = sphi 0, %s68
      %s72 = sphi 0, %s71
      %s88 = sphi 0, %s72
      %s94 = sphi 0, %s96
      %s97 = sphi 0, %s94
      %s98 = sphi 0, %s97
      %s114 = sphi 0, %s98
      %s122 = sphi 0, %s124
      %s125 = sphi 0, %s122
      %s126 = sphi 0, %s125
      %s142 = sphi 0, %s126
    $region4: #{tpu_custom_call.1} parent=1 // loop_header_branch
      %21 = sbr.rel (%p19) target = $region8
    $region5: #{tpu_custom_call.1} parent=1 // loop_body
      %s23 = ssub.s32 %s18, 1
      %s24 = ssub.s32 %s18, 2
      %s31 = sadd.s32 1, %s26
      %p32 = scmp.ge.s32.totalorder %s31, 1
      %s33 = scalar_select %p32, 0, %s31
      %s34 = sadd.s32 1, %s25
      %s35 = scalar_select %p32, %s34, %s25
      %p36 = scmp.ge.s32.totalorder %s35, 2
      %s37 = scalar_select %p36, 0, %s35
      %s38 = ssub.s32 %s25, %s37
      %s39 = ssub.s32 %s26, %s33
      %s40 = sor.u32 %s38, %s39
      %p41 = scmp.eq.s32.totalorder %s40, 0
      %s43 = sadd.s32 %s42, 1
      %s44 = scalar_select %p41, %s42, %s43
      %p47 = pneg %p41
      %p48 = scmp.eq.s32.totalorder %s18, 1
      %p49 = por %p47, %p48
      %p50 = scmp.ne.s32.totalorder %s42, %s45
      %p51 = scmp.eq.s32.totalorder %s18, 0
      %p52 = por %p50, %p51
      %p53 = scmp.ne.s32.totalorder %s42, %s45
      %p54 = scmp.eq.s32.totalorder %s23, 1
      %p55 = por %p53, %p54
      %p56 = scmp.ne.s32.totalorder %s45, %s46
      %p57 = scmp.eq.s32.totalorder %s23, 0
      %p58 = por %p56, %p57
      %p59 = scmp.ne.s32.totalorder %s45, %s46
      %p60 = scmp.eq.s32.totalorder %s24, 1
      %p61 = por %p59, %p60
      %p63 = scmp.ne.s32.totalorder %s46, %s62
      %p64 = scmp.eq.s32.totalorder %s24, 0
      %p65 = por %p63, %p64
      %s66 = ssub.s32 %s25, %s37
      %p67 = scmp.eq.s32.totalorder %s66, 0
      %s69 = sadd.s32 %s68, 1
      %s70 = scalar_select %p67, %s68, %s69
      %p73 = pneg %p67
      %p74 = scmp.eq.s32.totalorder %s18, 1
      %p75 = por %p73, %p74
      %p76 = scmp.ne.s32.totalorder %s68, %s71
      %p77 = scmp.eq.s32.totalorder %s18, 0
      %p78 = por %p76, %p77
      %p79 = scmp.ne.s32.totalorder %s68, %s71
      %p80 = scmp.eq.s32.totalorder %s23, 1
      %p81 = por %p79, %p80
      %p82 = scmp.ne.s32.totalorder %s71, %s72
      %p83 = scmp.eq.s32.totalorder %s23, 0
      %p84 = por %p82, %p83
      %p85 = scmp.ne.s32.totalorder %s71, %s72
      %p86 = scmp.eq.s32.totalorder %s24, 1
      %p87 = por %p85, %p86
      %p89 = scmp.ne.s32.totalorder %s72, %s88
      %p90 = scmp.eq.s32.totalorder %s24, 0
      %p91 = por %p89, %p90
      %s92 = ssub.s32 %s25, %s37
      %p93 = scmp.eq.s32.totalorder %s92, 0
      %s95 = sadd.s32 %s94, 1
      %s96 = scalar_select %p93, %s94, %s95
      %p99 = pneg %p93
      %p100 = scmp.eq.s32.totalorder %s18, 1
      %p101 = por %p99, %p100
      %p102 = scmp.ne.s32.totalorder %s94, %s97
      %p103 = scmp.eq.s32.totalorder %s18, 0
      %p104 = por %p102, %p103
      %p105 = scmp.ne.s32.totalorder %s94, %s97
      %p106 = scmp.eq.s32.totalorder %s23, 1
      %p107 = por %p105, %p106
      %p108 = scmp.ne.s32.totalorder %s97, %s98
      %p109 = scmp.eq.s32.totalorder %s23, 0
      %p110 = por %p108, %p109
      %p111 = scmp.ne.s32.totalorder %s97, %s98
      %p112 = scmp.eq.s32.totalorder %s24, 1
      %p113 = por %p111, %p112
      %p115 = scmp.ne.s32.totalorder %s98, %s114
      %p116 = scmp.eq.s32.totalorder %s24, 0
      %p117 = por %p115, %p116
      %s118 = ssub.s32 %s25, %s37
      %s119 = ssub.s32 %s26, %s33
      %s120 = sor.u32 %s118, %s119
      %p121 = scmp.eq.s32.totalorder %s120, 0
      %s123 = sadd.s32 %s122, 1
      %s124 = scalar_select %p121, %s122, %s123
      %p127 = pneg %p121
      %p128 = scmp.eq.s32.totalorder %s18, 1
      %p129 = por %p127, %p128
      %p130 = scmp.ne.s32.totalorder %s122, %s125
      %p131 = scmp.eq.s32.totalorder %s18, 0
      %p132 = por %p130, %p131
      %p133 = scmp.ne.s32.totalorder %s122, %s125
      %p134 = scmp.eq.s32.totalorder %s23, 1
      %p135 = por %p133, %p134
      %p136 = scmp.ne.s32.totalorder %s125, %s126
      %p137 = scmp.eq.s32.totalorder %s23, 0
      %p138 = por %p136, %p137
      %p139 = scmp.ne.s32.totalorder %s125, %s126
      %p140 = scmp.eq.s32.totalorder %s24, 1
      %p141 = por %p139, %p140
      %p143 = scmp.ne.s32.totalorder %s126, %s142
      %p144 = scmp.eq.s32.totalorder %s24, 0
      %p145 = por %p143, %p144
      %p146 = scmp.le.s32.totalorder 1, %s18
      %p147 = scmp.lt.s32.totalorder %s18, 3
      %p148 = pnand %p146, %p147
      %p149 = pneg %p148
      // Predicated region
      $region9: #{tpu_custom_call.1} parent=5 // pred_check
        _
      $region10: #{tpu_custom_call.1} parent=5 // pred_check_branch
        %151 = sbr.rel (%p148) target = $region12
      $region11: #{tpu_custom_call.1} parent=5 // pred_region
        %s152 = ssub.s32 %s18, 1
      $region12: #{tpu_custom_call.1} parent=5 // pred_fallthru
        _
      %p153 = scmp.lt.s32.totalorder %s18, 2
      // Predicated region
      $region13: #{tpu_custom_call.1} parent=5 // pred_check
        %p154 = pneg %p153
      $region14: #{tpu_custom_call.1} parent=5 // pred_check_branch
        %156 = sbr.rel (%p154) target = $region16
      $region15: #{tpu_custom_call.1} parent=5 // pred_region
        // Predicated region
        $region17: #{tpu_custom_call.1} parent=15 // pred_check
          %p157 = pneg %p52
        $region18: #{tpu_custom_call.1} parent=15 // pred_check_branch
          %159 = sbr.rel (%p157) target = $region20
        $region19: #{tpu_custom_call.1} parent=15 // pred_region
          %s160 = sand.u32 %s42, 1
          %s161 = scalar_lea.sflag [#allocation3], %s160
          %s162 = sand.u32 %s42, 1
          %s163 = smul.addr %s162, 8
          %s164 = scalar_lea.vmem [#allocation2], %s163
          %s166 = ssub.s32 128, 128
          %167 = vsyncadd %s161, %s166
          %s168 = sadd.s32 %s26, %s25
          %s169 = smul.addr %s168, 128
          %s170 = scalar_lea.hbm %s0, %s169
          %s172 = sshll.u32 %s164, 4
          %s173 = int_to_ptr.vmem [resolvable:$true] %s172
          %175 = dma.hbm_to_vmem [thread:$0]  %s170, 128, %s173, %s161
        $region20: #{tpu_custom_call.1} parent=15 // pred_fallthru
          _
        // Predicated region
        $region21: #{tpu_custom_call.1} parent=15 // pred_check
          %p176 = pneg %p78
        $region22: #{tpu_custom_call.1} parent=15 // pred_check_branch
          %178 = sbr.rel (%p176) target = $region24
        $region23: #{tpu_custom_call.1} parent=15 // pred_region
          %s179 = sand.u32 %s68, 1
          %s180 = scalar_lea.sflag [#allocation6], %s179
          %s181 = sand.u32 %s68, 1
          %s182 = scalar_lea.vmem [#allocation5], %s181
          %s184 = ssub.s32 16, 16
          %185 = vsyncadd %s180, %s184
          %s186 = smul.addr %s25, 16
          %s187 = scalar_lea.hbm %s1, %s186
          %s189 = sshll.u32 %s182, 4
          %s190 = int_to_ptr.vmem [resolvable:$true] %s189
          %192 = dma.hbm_to_vmem [thread:$0]  %s187, 16, %s190, %s180
        $region24: #{tpu_custom_call.1} parent=15 // pred_fallthru
          _
        // Predicated region
        $region25: #{tpu_custom_call.1} parent=15 // pred_check
          %p193 = pneg %p104
        $region26: #{tpu_custom_call.1} parent=15 // pred_check_branch
          %195 = sbr.rel (%p193) target = $region28
        $region27: #{tpu_custom_call.1} parent=15 // pred_region
          %p196 = scmp.lt.s32.totalorder %s25, 1
          %s197 = scalar_select %p196, %s25, 1
          %s198 = scalar_lea.vmem %s2, %s197
        $region28: #{tpu_custom_call.1} parent=15 // pred_fallthru
          _
      $region16: #{tpu_custom_call.1} parent=5 // pred_fallthru
        _
      %p199 = scmp.le.s32.totalorder 1, %s18
      %p200 = scmp.lt.s32.totalorder %s18, 3
      %p201 = pnand %p199, %p200
      %p202 = pneg %p201
      // Predicated region
      $region29: #{tpu_custom_call.1} parent=5 // pred_check
        _
      $region30: #{tpu_custom_call.1} parent=5 // pred_check_branch
        %204 = sbr.rel (%p201) target = $region32
      $region31: #{tpu_custom_call.1} parent=5 // pred_region
        %s205 = ssub.s32 %s18, 1
        %s206 = sand.u32 %s45, 1
        %s207 = scalar_lea.sflag [#allocation3], %s206
        %s208 = sand.u32 %s45, 1
        %s209 = smul.addr %s208, 8
        %s210 = scalar_lea.vmem [#allocation2], %s209
        // Predicated region
        $region33: #{tpu_custom_call.1} parent=31 // pred_check
          %p211 = pneg %p58
        $region34: #{tpu_custom_call.1} parent=31 // pred_check_branch
          %213 = sbr.rel (%p211) target = $region36
        $region35: #{tpu_custom_call.1} parent=31 // pred_region
          %214 = dma.done %s207, 128
        $region36: #{tpu_custom_call.1} parent=31 // pred_fallthru
          _
        %s215 = sand.u32 %s71, 1
        %s216 = scalar_lea.sflag [#allocation6], %s215
        %s217 = sand.u32 %s71, 1
        %s218 = scalar_lea.vmem [#allocation5], %s217
        // Predicated region
        $region37: #{tpu_custom_call.1} parent=31 // pred_check
          %p219 = pneg %p84
        $region38: #{tpu_custom_call.1} parent=31 // pred_check_branch
          %221 = sbr.rel (%p219) target = $region40
        $region39: #{tpu_custom_call.1} parent=31 // pred_region
          %222 = dma.done %s216, 16
        $region40: #{tpu_custom_call.1} parent=31 // pred_fallthru
          _
        %s223 = sand.u32 %s45, 1
        %s224 = scalar_lea.sflag [#allocation3], %s223
        %s225 = sand.u32 %s45, 1
        %s226 = smul.addr %s225, 8
        %s227 = scalar_lea.vmem [#allocation2], %s226
        %p228 = pneg %p58
        %p229 = pneg %p55
        %s230 = sand.u32 %s71, 1
        %s231 = scalar_lea.sflag [#allocation6], %s230
        %s232 = sand.u32 %s71, 1
        %s233 = scalar_lea.vmem [#allocation5], %s232
        %p234 = pneg %p84
        %p235 = pneg %p81
        %p236 = scmp.lt.s32.totalorder %s27, 1
        %s237 = scalar_select %p236, %s27, 1
        %s238 = scalar_lea.vmem %s2, %s237
        %p239 = pneg %p110
        %p240 = pneg %p107
        %p241 = pneg %p138
        %p242 = pneg %p135
        %s243 = sand.u32 %s125, 1
        %s244 = scalar_lea.sflag [#allocation4], %s243
        %s245 = sand.u32 %s125, 1
        %s246 = smul.addr %s245, 8
        %s247 = scalar_lea.vmem [#allocation7], %s246
        %p248 = scmp.lt.s32.totalorder %s27, 1
        %s249 = scalar_select %p248, %s27, 1
        %s250 = scalar_lea.vmem %s2, %s249
        %v251 = vld [vmem:[%s210] sm:$0xff]
        %vm252 = vcmask 261120
        %v253 = vsel %vm252, %v251, 0.0
        %254 = vadd.xlane.f32.xlu0 %v253
        %v255 = vpop.xlane.xlu0 %254
        %v256 = vrcp.pop 32.0
        %v257 = vmul.f32 %v255, %v256
        %v258 = vsub.f32 %v251, %v257
        %v259 = vmul.f32 %v258, %v258
        %v260 = vsel %vm252, %v259, 0.0
        %261 = vadd.xlane.f32.xlu0 %v260
        %v262 = vpop.xlane.xlu0 %261
        %v263 = vmul.f32 %v262, %v256
        %v264 = vadd.f32 %v263, 1e-06
        %v265 = vrsqrt.pop %v264
        %v266 = vld [vmem:[%s218] sm:$0x1]
        %v267 = vld [vmem:[%s250] sm:$0x1]
        %v268 = vadd.f32 %v266, 1.0
        %v270 = vlaneseq
        %v271 = vshrl.u32 %v270, 7
        %v272 = vsub.s32 0, %v271
        %v273 = vrot.slane %v268, %v272
        %v275 = vmul.f32 %v265, %v273
        %v276 = vmul.f32 %v258, %v275
        %v278 = vlaneseq
        %v279 = vshrl.u32 %v278, 7
        %v280 = vsub.s32 0, %v279
        %v281 = vrot.slane %v267, %v280
        %v283 = vadd.f32 %v276, %v281
        %284 = vst.msk [vmem:[%s247] sm:$0xff] %vm252, %v283
        %s285 = sand.u32 %s125, 1
        %s286 = scalar_lea.sflag [#allocation4], %s285
        %s287 = sand.u32 %s125, 1
        %s288 = smul.addr %s287, 8
        %s289 = scalar_lea.vmem [#allocation7], %s288
        // Predicated region
        $region41: #{tpu_custom_call.1} parent=31 // pred_check
          %p290 = pneg %p135
        $region42: #{tpu_custom_call.1} parent=31 // pred_check_branch
          %292 = sbr.rel (%p290) target = $region44
        $region43: #{tpu_custom_call.1} parent=31 // pred_region
          %s294 = ssub.s32 128, 128
          %295 = vsyncadd %s286, %s294
          %s296 = sadd.s32 %s28, %s27
          %s297 = smul.addr %s296, 128
          %s298 = scalar_lea.hbm %s3, %s297
          %s300 = sshll.u32 %s289, 4
          %s301 = int_to_ptr.vmem [resolvable:$true] %s300
          %303 = dma.vmem_to_hbm [thread:$0]  %s301, 128, %s298, %s286
        $region44: #{tpu_custom_call.1} parent=31 // pred_fallthru
          _
      $region32: #{tpu_custom_call.1} parent=5 // pred_fallthru
        _
      %p304 = scmp.le.s32.totalorder 2, %s18
      // Predicated region
      $region45: #{tpu_custom_call.1} parent=5 // pred_check
        %p305 = pneg %p304
      $region46: #{tpu_custom_call.1} parent=5 // pred_check_branch
        %307 = sbr.rel (%p305) target = $region48
      $region47: #{tpu_custom_call.1} parent=5 // pred_region
        %s308 = ssub.s32 %s18, 2
        // Predicated region
        $region49: #{tpu_custom_call.1} parent=47 // pred_check
          %p309 = pneg %p141
        $region50: #{tpu_custom_call.1} parent=47 // pred_check_branch
          %311 = sbr.rel (%p309) target = $region52
        $region51: #{tpu_custom_call.1} parent=47 // pred_region
          %s312 = sand.u32 %s126, 1
          %s313 = scalar_lea.sflag [#allocation4], %s312
          %s314 = sand.u32 %s126, 1
          %s315 = smul.addr %s314, 8
          %s316 = scalar_lea.vmem [#allocation7], %s315
          %317 = dma.done %s313, 128
        $region52: #{tpu_custom_call.1} parent=47 // pred_fallthru
          _
      $region48: #{tpu_custom_call.1} parent=5 // pred_fallthru
        _
    $region6: #{tpu_custom_call.1} parent=1 // loop_footer
      %s22 = sadd.s32 1, %s18
    $region7: #{tpu_custom_call.1} parent=1 // loop_footer_branch
      %17 = sbr.rel target = $region3
    $region8: #{tpu_custom_call.1} parent=1 // loop_exit
      _
    %318 = vsyncpa [#allocation3], 1
    %s319 = scalar_lea.sflag [#allocation3], 1
    %320 = vsyncpa %s319, 1
    %321 = vsyncpa [#allocation6], 1
    %s322 = scalar_lea.sflag [#allocation6], 1
    %323 = vsyncpa %s322, 1
    %324 = vsyncpa [#allocation4], 1
    %s325 = scalar_lea.sflag [#allocation4], 1
    %326 = vsyncpa %s325, 1

</llo_original>
